<compile_context>
chip_gen: v5e
topology: v5e:2x2
jax: 0.10.0
libtpu: 0.0.40
codegen_flags: <defaults>
</compile_context>

<pallas_src>
import jax
import jax.numpy as jnp
from jax.experimental import pallas as pl
from jax.experimental.pallas import tpu as pltpu

H1 = 128
H2 = 64


def _qnet_fused_kernel(x_ref, w1_ref, b1_ref, w2_ref, b2_ref, w3_ref, b3_ref, out_ref):
    # x_ref: (tile_B, A*n_obs) f32 block; weights are bf16 block-diagonal, biases f32.
    x = x_ref[...].astype(jnp.bfloat16)
    h1 = jnp.dot(x, w1_ref[...], preferred_element_type=jnp.float32) + b1_ref[...]
    h1 = jnp.maximum(h1, 0.0)                                  # ReLU (f32, VPU)
    h2 = jnp.dot(h1.astype(jnp.bfloat16), w2_ref[...],
                 preferred_element_type=jnp.float32) + b2_ref[...]
    h2 = jnp.maximum(h2, 0.0)                                  # ReLU (f32, VPU)
    q = jnp.dot(h2.astype(jnp.bfloat16), w3_ref[...],
                preferred_element_type=jnp.float32) + b3_ref[...]
    out_ref[...] = q                                           # lane-dense f32 store


def init_params(key, num_agents, n_obs, n_actions):
    """Per-agent stacked params, mirroring nn.Linear fan-in uniform init."""
    ks = jax.random.split(key, 6)

    def uni(k, shape, fan_in):
        bound = 1.0 / jnp.sqrt(fan_in)
        return jax.random.uniform(k, shape, jnp.float32, -bound, bound)

    w1 = uni(ks[0], (num_agents, n_obs, H1), n_obs)
    b1 = uni(ks[1], (num_agents, H1), n_obs)
    w2 = uni(ks[2], (num_agents, H1, H2), H1)
    b2 = uni(ks[3], (num_agents, H2), H1)
    w3 = uni(ks[4], (num_agents, H2, n_actions), H2)
    b3 = uni(ks[5], (num_agents, n_actions), H2)
    return (w1, b1, w2, b2, w3, b3)


def prepare_fused_params(params, n_actions):
    """One-time host-side assembly of block-diagonal bf16 weights + f32 biases."""
    w1, b1, w2, b2, w3, b3 = params
    A = w1.shape[0]

    def block_diag(w):
        a, k, n = w.shape
        eye = jnp.eye(a, dtype=w.dtype)
        # block (i, j) = w[i] if i == j else 0
        return jnp.einsum('akn,ab->akbn', w, eye).reshape(a * k, a * n)

    w1bd = block_diag(w1).astype(jnp.bfloat16)
    w2bd = block_diag(w2).astype(jnp.bfloat16)
    w3bd = block_diag(w3)                          # f32 until padded

    b1bd = b1.reshape(1, -1)                       # (1, A*H1) f32
    b2bd = b2.reshape(1, -1)                       # (1, A*H2) f32
    b3bd = b3.reshape(1, -1)                       # (1, A*n_act) f32

    # Lane-dense output: pad final output dim up to a multiple of 128.
    n_out = A * n_actions
    n_out_pad = max(128, ((n_out + 127) // 128) * 128)
    pad = n_out_pad - n_out
    if pad:
        w3bd = jnp.pad(w3bd, ((0, 0), (0, pad)))
        b3bd = jnp.pad(b3bd, ((0, 0), (0, pad)))
    w3bd = w3bd.astype(jnp.bfloat16)

    return (w1bd, b1bd, w2bd, b2bd, w3bd, b3bd)


def qnet_forward(obs, fused_params, num_agents, n_actions):
    """obs: (batch, num_agents, n_obs) f32 -> (batch, num_agents, n_actions) f32."""
    w1bd, b1bd, w2bd, b2bd, w3bd, b3bd = fused_params
    B, A, n_obs = obs.shape
    assert A == num_agents
    K1 = A * n_obs
    N3 = w3bd.shape[1]                                   # padded output width (>=128)

    x = obs.reshape(B, K1)                               # free, contiguous view

    # Batch tiling: multiple of 8 sublanes; cap tile at 1024 rows (safe for v7x VMEM).
    b_pad = max(8, ((B + 7) // 8) * 8)
    tile_b = min(b_pad, 1024)
    b_pad = ((b_pad + tile_b - 1) // tile_b) * tile_b
    if b_pad != B:
        x = jnp.pad(x, ((0, b_pad - B), (0, 0)))
    num_tiles = b_pad // tile_b

    out = pl.pallas_call(
        _qnet_fused_kernel,
        out_shape=jax.ShapeDtypeStruct((b_pad, N3), jnp.float32),
        grid_spec=pltpu.PrefetchScalarGridSpec(
            num_scalar_prefetch=0,
            grid=(num_tiles,),
            in_specs=[
                pl.BlockSpec((tile_b, K1), lambda i: (i, 0)),      # obs tile
                pl.BlockSpec(w1bd.shape, lambda i: (0, 0)),        # weights/biases:
                pl.BlockSpec(b1bd.shape, lambda i: (0, 0)),        # constant index_map
                pl.BlockSpec(w2bd.shape, lambda i: (0, 0)),        # -> stay VMEM-resident
                pl.BlockSpec(b2bd.shape, lambda i: (0, 0)),        #    across batch tiles
                pl.BlockSpec(w3bd.shape, lambda i: (0, 0)),
                pl.BlockSpec(b3bd.shape, lambda i: (0, 0)),
            ],
            out_specs=pl.BlockSpec((tile_b, N3), lambda i: (i, 0)),
        ),
        compiler_params=pltpu.CompilerParams(
            dimension_semantics=("parallel",),                     # batch axis -> megacore
        ),
    )(x, w1bd, b1bd, w2bd, b2bd, w3bd, b3bd)

    return out[:B, : A * n_actions].reshape(B, A, n_actions)


def qnet_reference(obs, params):
    """Pure-JAX f32 reference of the PyTorch forward (per-agent MLPs, cat on dim 1)."""
    w1, b1, w2, b2, w3, b3 = params
    outs = []
    for a in range(w1.shape[0]):
        x = obs[:, a, :]
        h1 = jnp.maximum(x @ w1[a] + b1[a], 0.0)
        h2 = jnp.maximum(h1 @ w2[a] + b2[a], 0.0)
        outs.append((h2 @ w3[a] + b3[a])[:, None, :])
    return jnp.concatenate(outs, axis=1)


# TODO(synk): QNet.sample_action (epsilon-greedy argmax + random actions) is host-side
# control logic, not part of forward(); it is intentionally not implemented as a kernel.

if __name__ == "__main__":
    key = jax.random.PRNGKey(0)
    k_obs, k_par = jax.random.split(key)

    batch = 8
    num_agents = 3
    n_obs = 16
    n_actions = 8

    obs = jax.random.normal(k_obs, (batch, num_agents, n_obs), jnp.float32)
    params = init_params(k_par, num_agents, n_obs, n_actions)
    fused = prepare_fused_params(params, n_actions)

    out = qnet_forward(obs, fused, num_agents, n_actions)
    out = jax.block_until_ready(out)

    ref = qnet_reference(obs, params)
    assert out.shape == (batch, num_agents, n_actions)
    # bf16 matmul inputs with f32 accumulation -> ~1e-2-level agreement vs f32 reference.
    assert jnp.allclose(out, ref, atol=5e-2, rtol=5e-2)

    print("KERNEL_OK")
</pallas_src>

<mosaic_0001>
module attributes {stable_mosaic.version = 11 : i64} {
  func.func @_qnet_fused_kernel(%arg0: i32, %arg1: memref<8x48xf32, #tpu.memory_space<vmem>>, %arg2: memref<48x384xbf16, #tpu.memory_space<vmem>>, %arg3: memref<1x384xf32, #tpu.memory_space<vmem>>, %arg4: memref<384x192xbf16, #tpu.memory_space<vmem>>, %arg5: memref<1x192xf32, #tpu.memory_space<vmem>>, %arg6: memref<192x128xbf16, #tpu.memory_space<vmem>>, %arg7: memref<1x128xf32, #tpu.memory_space<vmem>>, %arg8: memref<8x128xf32, #tpu.memory_space<vmem>>) attributes {dimension_semantics = [#tpu.dimension_semantics<parallel>], iteration_bounds = array<i64: 1>, scalar_prefetch = 0 : i64, scratch_operands = 0 : i64, tpu.core_type = #tpu.core_type<tc>, window_params = [{transform_indices = @transform_0, window_bounds = array<i64: 8, 48>}, {pipeline_mode = #tpu.pipeline_mode<synchronous>, transform_indices = @transform_1, window_bounds = array<i64: 48, 384>}, {pipeline_mode = #tpu.pipeline_mode<synchronous>, transform_indices = @transform_2, window_bounds = array<i64: 1, 384>}, {pipeline_mode = #tpu.pipeline_mode<synchronous>, transform_indices = @transform_3, window_bounds = array<i64: 384, 192>}, {pipeline_mode = #tpu.pipeline_mode<synchronous>, transform_indices = @transform_4, window_bounds = array<i64: 1, 192>}, {pipeline_mode = #tpu.pipeline_mode<synchronous>, transform_indices = @transform_5, window_bounds = array<i64: 192, 128>}, {pipeline_mode = #tpu.pipeline_mode<synchronous>, transform_indices = @transform_6, window_bounds = array<i64: 1, 128>}, {transform_indices = @transform_7, window_bounds = array<i64: 8, 128>}]} {
    %c0 = arith.constant 0 : index
    %c0_0 = arith.constant 0 : index
    %0 = vector.load %arg1[%c0, %c0_0] : memref<8x48xf32, #tpu.memory_space<vmem>>, vector<8x48xf32>
    %1 = arith.truncf %0 : vector<8x48xf32> to vector<8x48xbf16>
    %c0_1 = arith.constant 0 : index
    %c0_2 = arith.constant 0 : index
    %2 = vector.load %arg2[%c0_1, %c0_2] : memref<48x384xbf16, #tpu.memory_space<vmem>>, vector<48x384xbf16>
    %cst = arith.constant dense<0.000000e+00> : vector<8x384xf32>
    %3 = tpu.matmul %1, %2, %cst {dimension_numbers = #tpu.dot_dimension_numbers<[1], [0], [0], [1], [0, 0, 1, 1], [], []>} : vector<8x48xbf16>, vector<48x384xbf16>, vector<8x384xf32> -> vector<8x384xf32>
    %c0_3 = arith.constant 0 : index
    %c0_4 = arith.constant 0 : index
    %4 = vector.load %arg3[%c0_3, %c0_4] : memref<1x384xf32, #tpu.memory_space<vmem>>, vector<1x384xf32>
    %5 = vector.broadcast %4 : vector<1x384xf32> to vector<8x384xf32>
    %6 = arith.addf %3, %5 : vector<8x384xf32>
    %cst_5 = arith.constant 0.000000e+00 : f32
    %7 = vector.broadcast %cst_5 : f32 to vector<8x384xf32>
    %8 = arith.maximumf %6, %7 : vector<8x384xf32>
    %9 = arith.truncf %8 : vector<8x384xf32> to vector<8x384xbf16>
    %c0_6 = arith.constant 0 : index
    %c0_7 = arith.constant 0 : index
    %10 = vector.load %arg4[%c0_6, %c0_7] : memref<384x192xbf16, #tpu.memory_space<vmem>>, vector<384x192xbf16>
    %cst_8 = arith.constant dense<0.000000e+00> : vector<8x192xf32>
    %11 = tpu.matmul %9, %10, %cst_8 {dimension_numbers = #tpu.dot_dimension_numbers<[1], [0], [0], [1], [0, 0, 1, 1], [], []>} : vector<8x384xbf16>, vector<384x192xbf16>, vector<8x192xf32> -> vector<8x192xf32>
    %c0_9 = arith.constant 0 : index
    %c0_10 = arith.constant 0 : index
    %12 = vector.load %arg5[%c0_9, %c0_10] : memref<1x192xf32, #tpu.memory_space<vmem>>, vector<1x192xf32>
    %13 = vector.broadcast %12 : vector<1x192xf32> to vector<8x192xf32>
    %14 = arith.addf %11, %13 : vector<8x192xf32>
    %cst_11 = arith.constant 0.000000e+00 : f32
    %15 = vector.broadcast %cst_11 : f32 to vector<8x192xf32>
    %16 = arith.maximumf %14, %15 : vector<8x192xf32>
    %17 = arith.truncf %16 : vector<8x192xf32> to vector<8x192xbf16>
    %c0_12 = arith.constant 0 : index
    %c0_13 = arith.constant 0 : index
    %18 = vector.load %arg6[%c0_12, %c0_13] : memref<192x128xbf16, #tpu.memory_space<vmem>>, vector<192x128xbf16>
    %cst_14 = arith.constant dense<0.000000e+00> : vector<8x128xf32>
    %19 = tpu.matmul %17, %18, %cst_14 {dimension_numbers = #tpu.dot_dimension_numbers<[1], [0], [0], [1], [0, 0, 1, 1], [], []>} : vector<8x192xbf16>, vector<192x128xbf16>, vector<8x128xf32> -> vector<8x128xf32>
    %c0_15 = arith.constant 0 : index
    %c0_16 = arith.constant 0 : index
    %20 = vector.load %arg7[%c0_15, %c0_16] : memref<1x128xf32, #tpu.memory_space<vmem>>, vector<1x128xf32>
    %21 = vector.broadcast %20 : vector<1x128xf32> to vector<8x128xf32>
    %22 = arith.addf %19, %21 : vector<8x128xf32>
    %c0_17 = arith.constant 0 : index
    %c0_18 = arith.constant 0 : index
    %23 = vector.load %arg8[%c0_17, %c0_18] : memref<8x128xf32, #tpu.memory_space<vmem>>, vector<8x128xf32>
    tpu.vector_store %arg8[%c0_17, %c0_18], %22 {strides = array<i32>} : memref<8x128xf32, #tpu.memory_space<vmem>>, vector<8x128xf32>,
    return
  }
  func.func @transform_0(%arg0: i32) -> (i32, i32) {
    %c0_i32 = arith.constant 0 : i32
    %c0_i32_0 = arith.constant 0 : i32
    return %arg0, %c0_i32 : i32, i32
  }
  func.func @transform_1(%arg0: i32) -> (i32, i32) {
    %c0_i32 = arith.constant 0 : i32
    %c0_i32_0 = arith.constant 0 : i32
    %c0_i32_1 = arith.constant 0 : i32
    return %c0_i32, %c0_i32_0 : i32, i32
  }
  func.func @transform_2(%arg0: i32) -> (i32, i32) {
    %c0_i32 = arith.constant 0 : i32
    %c0_i32_0 = arith.constant 0 : i32
    %c0_i32_1 = arith.constant 0 : i32
    return %c0_i32, %c0_i32_0 : i32, i32
  }
  func.func @transform_3(%arg0: i32) -> (i32, i32) {
    %c0_i32 = arith.constant 0 : i32
    %c0_i32_0 = arith.constant 0 : i32
    %c0_i32_1 = arith.constant 0 : i32
    return %c0_i32, %c0_i32_0 : i32, i32
  }
  func.func @transform_4(%arg0: i32) -> (i32, i32) {
    %c0_i32 = arith.constant 0 : i32
    %c0_i32_0 = arith.constant 0 : i32
    %c0_i32_1 = arith.constant 0 : i32
    return %c0_i32, %c0_i32_0 : i32, i32
  }
  func.func @transform_5(%arg0: i32) -> (i32, i32) {
    %c0_i32 = arith.constant 0 : i32
    %c0_i32_0 = arith.constant 0 : i32
    %c0_i32_1 = arith.constant 0 : i32
    return %c0_i32, %c0_i32_0 : i32, i32
  }
  func.func @transform_6(%arg0: i32) -> (i32, i32) {
    %c0_i32 = arith.constant 0 : i32
    %c0_i32_0 = arith.constant 0 : i32
    %c0_i32_1 = arith.constant 0 : i32
    return %c0_i32, %c0_i32_0 : i32, i32
  }
  func.func @transform_7(%arg0: i32) -> (i32, i32) {
    %c0_i32 = arith.constant 0 : i32
    %c0_i32_0 = arith.constant 0 : i32
    return %arg0, %c0_i32 : i32, i32
  }
}

</mosaic_0001>

<llo_original>
// kernel: tpu_custom_call.1
$region0: #{tpu_custom_call.1}
  #allocation0 [shape = 'u32[]', space=smem, size = 0x4, offset = 0x4, fixed_abs, tag = 'smem constant byte address 0x4 - core index']
  #allocation1 [shape = 'u32[72,128]{1,0:T(1,128)}', space=vmem, size = 0x9000, scoped, tag = 'internal scratch']
  %s0 = inlined_call_operand.vmem [shape: f32[8,48], index: 0, kind: input, shape index: {}]
  %s1 = inlined_call_operand.vmem [shape: bf16[48,384], index: 1, kind: input, shape index: {}]
  %s2 = inlined_call_operand.vmem [shape: f32[1,384], index: 2, kind: input, shape index: {}]
  %s3 = inlined_call_operand.vmem [shape: bf16[384,192], index: 3, kind: input, shape index: {}]
  %s4 = inlined_call_operand.vmem [shape: f32[1,192], index: 4, kind: input, shape index: {}]
  %s5 = inlined_call_operand.vmem [shape: bf16[192,128], index: 5, kind: input, shape index: {}]
  %s6 = inlined_call_operand.vmem [shape: f32[1,128], index: 6, kind: input, shape index: {}]
  %s7 = inlined_call_operand.hbm [shape: f32[8,128], index: 7, kind: output, shape index: {}]
  %s8 = sld [smem:[#allocation0]]
  $region38: #{tpu_custom_call.1} parent=0
    _
  %s10 = ssub.s32 1, %s8
  %s11 = scalar_select 0, %s10, %s8
  $region1: #{tpu_custom_call.1} parent=0
    #allocation2 [shape = 'u8[4096]{0}', space=vmem, size = 0x1000, scoped, tag = 'output window, operand 0, single buffered']
    #allocation3 [shape = 's32[1]{0}', space=sflag, size = 0x4, scoped, tag = 'scoped memory for tpu_custom_call.1']
    %12 = vsyncpa [#allocation3], 0
    // Predicated region
    $region2: #{tpu_custom_call.1} parent=1 // pred_check
      _
    $region3: #{tpu_custom_call.1} parent=1 // pred_check_branch
      %14 = sbr.rel (0) target = $region5
    $region4: #{tpu_custom_call.1} parent=1 // pred_region
      _
    $region5: #{tpu_custom_call.1} parent=1 // pred_fallthru
      _
    // Predicated region
    $region6: #{tpu_custom_call.1} parent=1 // pred_check
      _
    $region7: #{tpu_custom_call.1} parent=1 // pred_check_branch
      %16 = sbr.rel (0) target = $region9
    $region8: #{tpu_custom_call.1} parent=1 // pred_region
      _
    $region9: #{tpu_custom_call.1} parent=1 // pred_fallthru
      _
    // Predicated region
    $region10: #{tpu_custom_call.1} parent=1 // pred_check
      _
    $region11: #{tpu_custom_call.1} parent=1 // pred_check_branch
      %18 = sbr.rel (0) target = $region13
    $region12: #{tpu_custom_call.1} parent=1 // pred_region
      _
    $region13: #{tpu_custom_call.1} parent=1 // pred_fallthru
      _
    // Predicated region
    $region14: #{tpu_custom_call.1} parent=1 // pred_check
      _
    $region15: #{tpu_custom_call.1} parent=1 // pred_check_branch
      %20 = sbr.rel (0) target = $region17
    $region16: #{tpu_custom_call.1} parent=1 // pred_region
      _
    $region17: #{tpu_custom_call.1} parent=1 // pred_fallthru
      _
    // Predicated region
    $region18: #{tpu_custom_call.1} parent=1 // pred_check
      _
    $region19: #{tpu_custom_call.1} parent=1 // pred_check_branch
      %22 = sbr.rel (0) target = $region21
    $region20: #{tpu_custom_call.1} parent=1 // pred_region
      _
    $region21: #{tpu_custom_call.1} parent=1 // pred_fallthru
      _
    // Predicated region
    $region22: #{tpu_custom_call.1} parent=1 // pred_check
      _
    $region23: #{tpu_custom_call.1} parent=1 // pred_check_branch
      %24 = sbr.rel (0) target = $region25
    $region24: #{tpu_custom_call.1} parent=1 // pred_region
      _
    $region25: #{tpu_custom_call.1} parent=1 // pred_fallthru
      _
    // Predicated region
    $region26: #{tpu_custom_call.1} parent=1 // pred_check
      _
    $region27: #{tpu_custom_call.1} parent=1 // pred_check_branch
      %26 = sbr.rel (0) target = $region29
    $region28: #{tpu_custom_call.1} parent=1 // pred_region
      _
    $region29: #{tpu_custom_call.1} parent=1 // pred_fallthru
      _
    %v28 = vld [vmem:[%s0] sm:$0xff]
    %v29 = vpack.c.bf16 %v28, %v28
    %v30 = vld [vmem:[%s1] sm:$0xff]
    %v31 = vld [vmem:[%s1 + $0x8] sm:$0xf]
    %v32 = vld [vmem:[%s1 + $0xc] sm:$0xff]
    %v33 = vld [vmem:[%s1 + $0x14] sm:$0xf]
    %v34 = vld [vmem:[%s1 + $0x18] sm:$0xff]
    %v35 = vld [vmem:[%s1 + $0x20] sm:$0xf]
    %v36 = vld [vmem:[%s1 + $0x24] sm:$0xff]
    %v37 = vld [vmem:[%s1 + $0x2c] sm:$0xf]
    %v38 = vld [vmem:[%s1 + $0x30] sm:$0xff]
    %v39 = vld [vmem:[%s1 + $0x38] sm:$0xf]
    %v40 = vld [vmem:[%s1 + $0x3c] sm:$0xff]
    %v41 = vld [vmem:[%s1 + $0x44] sm:$0xf]
    %v42 = vld [vmem:[%s2] sm:$0x7]
    %v44 = vperm.slane %v42, 0
    %v45 = vperm.slane %v42, 1
    %v46 = vperm.slane %v42, 2
    %v62 = vunpack.c.l.b16 %v30
    %v63 = vunpack.c.h.b16 %v30
    %v64 = vunpack.c.l.b16 %v31
    %v65 = vunpack.c.l.b16 %v32
    %v66 = vunpack.c.h.b16 %v32
    %v67 = vunpack.c.l.b16 %v33
    %v68 = vunpack.c.l.b16 %v34
    %v69 = vunpack.c.h.b16 %v34
    %v70 = vunpack.c.l.b16 %v35
    %v71 = vunpack.c.l.b16 %v36
    %v72 = vunpack.c.h.b16 %v36
    %v73 = vunpack.c.l.b16 %v37
    %v74 = vunpack.c.l.b16 %v38
    %v75 = vunpack.c.h.b16 %v38
    %v76 = vunpack.c.l.b16 %v39
    %v77 = vunpack.c.l.b16 %v40
    %v78 = vunpack.c.h.b16 %v40
    %v79 = vunpack.c.l.b16 %v41
    %v80 = vpack.c.b16 %v65, %v62
    %v81 = vpack.c.b16 %v66, %v63
    %v82 = vpack.c.b16 %v67, %v64
    %v83 = vpack.c.b16 %v71, %v68
    %v84 = vpack.c.b16 %v72, %v69
    %v85 = vpack.c.b16 %v73, %v70
    %v86 = vpack.c.b16 %v77, %v74
    %v87 = vpack.c.b16 %v78, %v75
    %v88 = vpack.c.b16 %v79, %v76
    %vm98 = vcmask 392192
    %v100 = vsel %vm98, %v29, 0
    %102 = vmatpush.bf16.msra.mxu0 0
    %103 = vmatpush.bf16.msra.mxu0 0
    %104 = vmatpush.bf16.msra.mxu0 0
    %105 = vmatpush.bf16.msra.mxu0 0
    %106 = vmatpush.bf16.msra.mxu0 0
    %107 = vmatpush.bf16.msra.mxu0 %v86
    %108 = vmatpush.bf16.msra.mxu0 %v83
    %109 = vmatpush.bf16.msra.mxu0 %v80
    %110 = vmatmul.bf16.gmra.mxu0 %v100
    %v111 = vpop.f32.mrf.mxu0
    %v112 = vadd.f32 %v44, %v111
    %v113 = vpop.f32.mrf.mxu0
    %114 = vdwg.mxu0
    %115 = vmatpush.bf16.msra.mxu0 0
    %116 = vmatpush.bf16.msra.mxu0 0
    %117 = vmatpush.bf16.msra.mxu0 0
    %118 = vmatpush.bf16.msra.mxu0 0
    %119 = vmatpush.bf16.msra.mxu0 0
    %120 = vmatpush.bf16.msra.mxu0 %v87
    %121 = vmatpush.bf16.msra.mxu0 %v84
    %122 = vmatpush.bf16.msra.mxu0 %v81
    %123 = vmatmul.bf16.gmra.mxu0 %v100
    %v124 = vpop.f32.mrf.mxu0
    %v125 = vadd.f32 %v45, %v124
    %v126 = vpop.f32.mrf.mxu0
    %127 = vdwg.mxu0
    %128 = vmatpush.bf16.msra.mxu0 0
    %129 = vmatpush.bf16.msra.mxu0 0
    %130 = vmatpush.bf16.msra.mxu0 0
    %131 = vmatpush.bf16.msra.mxu0 0
    %132 = vmatpush.bf16.msra.mxu0 0
    %133 = vmatpush.bf16.msra.mxu0 %v88
    %134 = vmatpush.bf16.msra.mxu0 %v85
    %135 = vmatpush.bf16.msra.mxu0 %v82
    %136 = vmatmul.bf16.gmra.mxu0 %v100
    %v137 = vpop.f32.mrf.mxu0
    %v138 = vadd.f32 %v46, %v137
    %v139 = vpop.f32.mrf.mxu0
    %140 = vdwg.mxu0
    %v141 = vmax.f32 %v112, 0.0
    %v142 = vmax.f32 %v125, 0.0
    %v143 = vmax.f32 %v138, 0.0
    %v144 = vpack.c.bf16 %v141, %v141
    %v145 = vpack.c.bf16 %v142, %v142
    %v146 = vpack.c.bf16 %v143, %v143
    %v147 = vld [vmem:[%s3] sm:$0xff]
    %v148 = vld [vmem:[%s3 + $0x8] sm:$0xff]
    %v149 = vld [vmem:[%s3 + $0x10] sm:$0xff]
    %v150 = vld [vmem:[%s3 + $0x18] sm:$0xff]
    %v151 = vld [vmem:[%s3 + $0x20] sm:$0xff]
    %v152 = vld [vmem:[%s3 + $0x28] sm:$0xff]
    %v153 = vld [vmem:[%s3 + $0x30] sm:$0xff]
    %v154 = vld [vmem:[%s3 + $0x38] sm:$0xff]
    %v155 = vld [vmem:[%s3 + $0x40] sm:$0xff]
    %v156 = vld [vmem:[%s3 + $0x48] sm:$0xff]
    %v157 = vld [vmem:[%s3 + $0x50] sm:$0xff]
    %v158 = vld [vmem:[%s3 + $0x58] sm:$0xff]
    %v159 = vld [vmem:[%s3 + $0x60] sm:$0xff]
    %v160 = vld [vmem:[%s3 + $0x68] sm:$0xff]
    %v161 = vld [vmem:[%s3 + $0x70] sm:$0xff]
    %v162 = vld [vmem:[%s3 + $0x78] sm:$0xff]
    %v163 = vld [vmem:[%s3 + $0x80] sm:$0xff]
    %v164 = vld [vmem:[%s3 + $0x88] sm:$0xff]
    %v165 = vld [vmem:[%s3 + $0x90] sm:$0xff]
    %v166 = vld [vmem:[%s3 + $0x98] sm:$0xff]
    %v167 = vld [vmem:[%s3 + $0xa0] sm:$0xff]
    %v168 = vld [vmem:[%s3 + $0xa8] sm:$0xff]
    %v169 = vld [vmem:[%s3 + $0xb0] sm:$0xff]
    %v170 = vld [vmem:[%s3 + $0xb8] sm:$0xff]
    %v171 = vld [vmem:[%s3 + $0xc0] sm:$0xff]
    %v172 = vld [vmem:[%s3 + $0xc8] sm:$0xff]
    %v173 = vld [vmem:[%s3 + $0xd0] sm:$0xff]
    %v174 = vld [vmem:[%s3 + $0xd8] sm:$0xff]
    %v175 = vld [vmem:[%s3 + $0xe0] sm:$0xff]
    %v176 = vld [vmem:[%s3 + $0xe8] sm:$0xff]
    %v177 = vld [vmem:[%s3 + $0xf0] sm:$0xff]
    %v178 = vld [vmem:[%s3 + $0xf8] sm:$0xff]
    %v179 = vld [vmem:[%s3 + $0x100] sm:$0xff]
    %v180 = vld [vmem:[%s3 + $0x108] sm:$0xff]
    %v181 = vld [vmem:[%s3 + $0x110] sm:$0xff]
    %v182 = vld [vmem:[%s3 + $0x118] sm:$0xff]
    %v183 = vld [vmem:[%s3 + $0x120] sm:$0xff]
    %v184 = vld [vmem:[%s3 + $0x128] sm:$0xff]
    %v185 = vld [vmem:[%s3 + $0x130] sm:$0xff]
    %v186 = vld [vmem:[%s3 + $0x138] sm:$0xff]
    %v187 = vld [vmem:[%s3 + $0x140] sm:$0xff]
    %v188 = vld [vmem:[%s3 + $0x148] sm:$0xff]
    %v189 = vld [vmem:[%s3 + $0x150] sm:$0xff]
    %v190 = vld [vmem:[%s3 + $0x158] sm:$0xff]
    %v191 = vld [vmem:[%s3 + $0x160] sm:$0xff]
    %v192 = vld [vmem:[%s3 + $0x168] sm:$0xff]
    %v193 = vld [vmem:[%s3 + $0x170] sm:$0xff]
    %v194 = vld [vmem:[%s3 + $0x178] sm:$0xff]
    %v195 = vld [vmem:[%s4] sm:$0x3]
    %v197 = vperm.slane %v195, 0
    %v198 = vperm.slane %v195, 1
    %v249 = vunpack.c.l.b16 %v147
    %v250 = vunpack.c.h.b16 %v147
    %v251 = vunpack.c.l.b16 %v148
    %v252 = vunpack.c.h.b16 %v148
    %v253 = vunpack.c.l.b16 %v149
    %v254 = vunpack.c.h.b16 %v149
    %v255 = vunpack.c.l.b16 %v150
    %v256 = vunpack.c.h.b16 %v150
    %v257 = vunpack.c.l.b16 %v151
    %v258 = vunpack.c.h.b16 %v151
    %v259 = vunpack.c.l.b16 %v152
    %v260 = vunpack.c.h.b16 %v152
    %v261 = vunpack.c.l.b16 %v153
    %v262 = vunpack.c.h.b16 %v153
    %v263 = vunpack.c.l.b16 %v154
    %v264 = vunpack.c.h.b16 %v154
    %v265 = vunpack.c.l.b16 %v155
    %v266 = vunpack.c.h.b16 %v155
    %v267 = vunpack.c.l.b16 %v156
    %v268 = vunpack.c.h.b16 %v156
    %v269 = vunpack.c.l.b16 %v157
    %v270 = vunpack.c.h.b16 %v157
    %v271 = vunpack.c.l.b16 %v158
    %v272 = vunpack.c.h.b16 %v158
    %v273 = vunpack.c.l.b16 %v159
    %v274 = vunpack.c.h.b16 %v159
    %v275 = vunpack.c.l.b16 %v160
    %v276 = vunpack.c.h.b16 %v160
    %v277 = vunpack.c.l.b16 %v161
    %v278 = vunpack.c.h.b16 %v161
    %v279 = vunpack.c.l.b16 %v162
    %v280 = vunpack.c.h.b16 %v162
    %v281 = vunpack.c.l.b16 %v163
    %v282 = vunpack.c.h.b16 %v163
    %v283 = vunpack.c.l.b16 %v164
    %v284 = vunpack.c.h.b16 %v164
    %v285 = vunpack.c.l.b16 %v165
    %v286 = vunpack.c.h.b16 %v165
    %v287 = vunpack.c.l.b16 %v166
    %v288 = vunpack.c.h.b16 %v166
    %v289 = vunpack.c.l.b16 %v167
    %v290 = vunpack.c.h.b16 %v167
    %v291 = vunpack.c.l.b16 %v168
    %v292 = vunpack.c.h.b16 %v168
    %v293 = vunpack.c.l.b16 %v169
    %v294 = vunpack.c.h.b16 %v169
    %v295 = vunpack.c.l.b16 %v170
    %v296 = vunpack.c.h.b16 %v170
    %v297 = vunpack.c.l.b16 %v171
    %v298 = vunpack.c.h.b16 %v171
    %v299 = vunpack.c.l.b16 %v172
    %v300 = vunpack.c.h.b16 %v172
    %v301 = vunpack.c.l.b16 %v173
    %v302 = vunpack.c.h.b16 %v173
    %v303 = vunpack.c.l.b16 %v174
    %v304 = vunpack.c.h.b16 %v174
    %v305 = vunpack.c.l.b16 %v175
    %v306 = vunpack.c.h.b16 %v175
    %v307 = vunpack.c.l.b16 %v176
    %v308 = vunpack.c.h.b16 %v176
    %v309 = vunpack.c.l.b16 %v177
    %v310 = vunpack.c.h.b16 %v177
    %v311 = vunpack.c.l.b16 %v178
    %v312 = vunpack.c.h.b16 %v178
    %v313 = vunpack.c.l.b16 %v179
    %v314 = vunpack.c.h.b16 %v179
    %v315 = vunpack.c.l.b16 %v180
    %v316 = vunpack.c.h.b16 %v180
    %v317 = vunpack.c.l.b16 %v181
    %v318 = vunpack.c.h.b16 %v181
    %v319 = vunpack.c.l.b16 %v182
    %v320 = vunpack.c.h.b16 %v182
    %v321 = vunpack.c.l.b16 %v183
    %v322 = vunpack.c.h.b16 %v183
    %v323 = vunpack.c.l.b16 %v184
    %v324 = vunpack.c.h.b16 %v184
    %v325 = vunpack.c.l.b16 %v185
    %v326 = vunpack.c.h.b16 %v185
    %v327 = vunpack.c.l.b16 %v186
    %v328 = vunpack.c.h.b16 %v186
    %v329 = vunpack.c.l.b16 %v187
    %v330 = vunpack.c.h.b16 %v187
    %v331 = vunpack.c.l.b16 %v188
    %v332 = vunpack.c.h.b16 %v188
    %v333 = vunpack.c.l.b16 %v189
    %v334 = vunpack.c.h.b16 %v189
    %v335 = vunpack.c.l.b16 %v190
    %v336 = vunpack.c.h.b16 %v190
    %v337 = vunpack.c.l.b16 %v191
    %v338 = vunpack.c.h.b16 %v191
    %v339 = vunpack.c.l.b16 %v192
    %v340 = vunpack.c.h.b16 %v192
    %v341 = vunpack.c.l.b16 %v193
    %v342 = vunpack.c.h.b16 %v193
    %v343 = vunpack.c.l.b16 %v194
    %v344 = vunpack.c.h.b16 %v194
    %v345 = vpack.c.b16 %v251, %v249
    %v346 = vpack.c.b16 %v252, %v250
    %v347 = vpack.c.b16 %v255, %v253
    %v348 = vpack.c.b16 %v256, %v254
    %v349 = vpack.c.b16 %v259, %v257
    %v350 = vpack.c.b16 %v260, %v258
    %v351 = vpack.c.b16 %v263, %v261
    %v352 = vpack.c.b16 %v264, %v262
    %v353 = vpack.c.b16 %v267, %v265
    %v354 = vpack.c.b16 %v268, %v266
    %v355 = vpack.c.b16 %v271, %v269
    %v356 = vpack.c.b16 %v272, %v270
    %v357 = vpack.c.b16 %v275, %v273
    %v358 = vpack.c.b16 %v276, %v274
    %v359 = vpack.c.b16 %v279, %v277
    %v360 = vpack.c.b16 %v280, %v278
    %v361 = vpack.c.b16 %v283, %v281
    %v362 = vpack.c.b16 %v284, %v282
    %v363 = vpack.c.b16 %v287, %v285
    %v364 = vpack.c.b16 %v288, %v286
    %v365 = vpack.c.b16 %v291, %v289
    %v366 = vpack.c.b16 %v292, %v290
    %v367 = vpack.c.b16 %v295, %v293
    %v368 = vpack.c.b16 %v296, %v294
    %v369 = vpack.c.b16 %v299, %v297
    %v370 = vpack.c.b16 %v300, %v298
    %v371 = vpack.c.b16 %v303, %v301
    %v372 = vpack.c.b16 %v304, %v302
    %v373 = vpack.c.b16 %v307, %v305
    %v374 = vpack.c.b16 %v308, %v306
    %v375 = vpack.c.b16 %v311, %v309
    %v376 = vpack.c.b16 %v312, %v310
    %v377 = vpack.c.b16 %v315, %v313
    %v378 = vpack.c.b16 %v316, %v314
    %v379 = vpack.c.b16 %v319, %v317
    %v380 = vpack.c.b16 %v320, %v318
    %v381 = vpack.c.b16 %v323, %v321
    %v382 = vpack.c.b16 %v324, %v322
    %v383 = vpack.c.b16 %v327, %v325
    %v384 = vpack.c.b16 %v328, %v326
    %v385 = vpack.c.b16 %v331, %v329
    %v386 = vpack.c.b16 %v332, %v330
    %v387 = vpack.c.b16 %v335, %v333
    %v388 = vpack.c.b16 %v336, %v334
    %v389 = vpack.c.b16 %v339, %v337
    %v390 = vpack.c.b16 %v340, %v338
    %v391 = vpack.c.b16 %v343, %v341
    %v392 = vpack.c.b16 %v344, %v342
    %441 = vmatpush.bf16.msra.mxu0 %v359
    %442 = vmatpush.bf16.msra.mxu0 %v357
    %443 = vmatpush.bf16.msra.mxu0 %v355
    %444 = vmatpush.bf16.msra.mxu0 %v353
    %445 = vmatpush.bf16.msra.mxu0 %v351
    %446 = vmatpush.bf16.msra.mxu0 %v349
    %447 = vmatpush.bf16.msra.mxu0 %v347
    %448 = vmatpush.bf16.msra.mxu0 %v345
    %449 = vmatmul.bf16.gmra.mxu0 %v144
    %v450 = vpop.f32.mrf.mxu0
    %v451 = vadd.f32 %v197, %v450
    %v452 = vpop.f32.mrf.mxu0
    %453 = vdwg.mxu0
    %454 = vmatpush.bf16.msra.mxu0 %v375
    %455 = vmatpush.bf16.msra.mxu0 %v373
    %456 = vmatpush.bf16.msra.mxu0 %v371
    %457 = vmatpush.bf16.msra.mxu0 %v369
    %458 = vmatpush.bf16.msra.mxu0 %v367
    %459 = vmatpush.bf16.msra.mxu0 %v365
    %460 = vmatpush.bf16.msra.mxu0 %v363
    %461 = vmatpush.bf16.msra.mxu0 %v361
    %462 = vmatmul.bf16.gmra.mxu0 %v145
    %v463 = vpop.f32.mrf.mxu0
    %v464 = vadd.f32 %v451, %v463
    %v465 = vpop.f32.mrf.mxu0
    %466 = vdwg.mxu0
    %467 = vmatpush.bf16.msra.mxu0 %v391
    %468 = vmatpush.bf16.msra.mxu0 %v389
    %469 = vmatpush.bf16.msra.mxu0 %v387
    %470 = vmatpush.bf16.msra.mxu0 %v385
    %471 = vmatpush.bf16.msra.mxu0 %v383
    %472 = vmatpush.bf16.msra.mxu0 %v381
    %473 = vmatpush.bf16.msra.mxu0 %v379
    %474 = vmatpush.bf16.msra.mxu0 %v377
    %475 = vmatmul.bf16.gmra.mxu0 %v146
    %v476 = vpop.f32.mrf.mxu0
    %v477 = vadd.f32 %v464, %v476
    %v478 = vpop.f32.mrf.mxu0
    %479 = vdwg.mxu0
    %480 = vmatpush.bf16.msra.mxu0 %v360
    %481 = vmatpush.bf16.msra.mxu0 %v358
    %482 = vmatpush.bf16.msra.mxu0 %v356
    %483 = vmatpush.bf16.msra.mxu0 %v354
    %484 = vmatpush.bf16.msra.mxu0 %v352
    %485 = vmatpush.bf16.msra.mxu0 %v350
    %486 = vmatpush.bf16.msra.mxu0 %v348
    %487 = vmatpush.bf16.msra.mxu0 %v346
    %488 = vmatmul.bf16.gmra.mxu0 %v144
    %v489 = vpop.f32.mrf.mxu0
    %v490 = vadd.f32 %v198, %v489
    %v491 = vpop.f32.mrf.mxu0
    %492 = vdwg.mxu0
    %493 = vmatpush.bf16.msra.mxu0 %v376
    %494 = vmatpush.bf16.msra.mxu0 %v374
    %495 = vmatpush.bf16.msra.mxu0 %v372
    %496 = vmatpush.bf16.msra.mxu0 %v370
    %497 = vmatpush.bf16.msra.mxu0 %v368
    %498 = vmatpush.bf16.msra.mxu0 %v366
    %499 = vmatpush.bf16.msra.mxu0 %v364
    %500 = vmatpush.bf16.msra.mxu0 %v362
    %501 = vmatmul.bf16.gmra.mxu0 %v145
    %v502 = vpop.f32.mrf.mxu0
    %v503 = vadd.f32 %v490, %v502
    %v504 = vpop.f32.mrf.mxu0
    %505 = vdwg.mxu0
    %506 = vmatpush.bf16.msra.mxu0 %v392
    %507 = vmatpush.bf16.msra.mxu0 %v390
    %508 = vmatpush.bf16.msra.mxu0 %v388
    %509 = vmatpush.bf16.msra.mxu0 %v386
    %510 = vmatpush.bf16.msra.mxu0 %v384
    %511 = vmatpush.bf16.msra.mxu0 %v382
    %512 = vmatpush.bf16.msra.mxu0 %v380
    %513 = vmatpush.bf16.msra.mxu0 %v378
    %514 = vmatmul.bf16.gmra.mxu0 %v146
    %v515 = vpop.f32.mrf.mxu0
    %v516 = vadd.f32 %v503, %v515
    %v517 = vpop.f32.mrf.mxu0
    %518 = vdwg.mxu0
    %v519 = vmax.f32 %v477, 0.0
    %v520 = vmax.f32 %v516, 0.0
    %v521 = vpack.c.bf16 %v519, %v519
    %v522 = vpack.c.bf16 %v520, %v520
    %v523 = vld [vmem:[%s5] sm:$0xf]
    %v524 = vld [vmem:[%s5 + $0x4] sm:$0xf]
    %v525 = vld [vmem:[%s5 + $0x8] sm:$0xf]
    %v526 = vld [vmem:[%s5 + $0xc] sm:$0xf]
    %v527 = vld [vmem:[%s5 + $0x10] sm:$0xf]
    %v528 = vld [vmem:[%s5 + $0x14] sm:$0xf]
    %v529 = vld [vmem:[%s5 + $0x18] sm:$0xf]
    %v530 = vld [vmem:[%s5 + $0x1c] sm:$0xf]
    %v531 = vld [vmem:[%s5 + $0x20] sm:$0xf]
    %v532 = vld [vmem:[%s5 + $0x24] sm:$0xf]
    %v533 = vld [vmem:[%s5 + $0x28] sm:$0xf]
    %v534 = vld [vmem:[%s5 + $0x2c] sm:$0xf]
    %v535 = vld [vmem:[%s5 + $0x30] sm:$0xf]
    %v536 = vld [vmem:[%s5 + $0x34] sm:$0xf]
    %v537 = vld [vmem:[%s5 + $0x38] sm:$0xf]
    %v538 = vld [vmem:[%s5 + $0x3c] sm:$0xf]
    %v539 = vld [vmem:[%s5 + $0x40] sm:$0xf]
    %v540 = vld [vmem:[%s5 + $0x44] sm:$0xf]
    %v541 = vld [vmem:[%s5 + $0x48] sm:$0xf]
    %v542 = vld [vmem:[%s5 + $0x4c] sm:$0xf]
    %v543 = vld [vmem:[%s5 + $0x50] sm:$0xf]
    %v544 = vld [vmem:[%s5 + $0x54] sm:$0xf]
    %v545 = vld [vmem:[%s5 + $0x58] sm:$0xf]
    %v546 = vld [vmem:[%s5 + $0x5c] sm:$0xf]
    %v547 = vld [vmem:[%s6] sm:$0x1]
    %v549 = vperm.slane %v547, 0
    %v575 = vunpack.c.l.b16 %v523
    %v576 = vunpack.c.l.b16 %v524
    %v577 = vunpack.c.l.b16 %v525
    %v578 = vunpack.c.l.b16 %v526
    %v579 = vunpack.c.l.b16 %v527
    %v580 = vunpack.c.l.b16 %v528
    %v581 = vunpack.c.l.b16 %v529
    %v582 = vunpack.c.l.b16 %v530
    %v583 = vunpack.c.l.b16 %v531
    %v584 = vunpack.c.l.b16 %v532
    %v585 = vunpack.c.l.b16 %v533
    %v586 = vunpack.c.l.b16 %v534
    %v587 = vunpack.c.l.b16 %v535
    %v588 = vunpack.c.l.b16 %v536
    %v589 = vunpack.c.l.b16 %v537
    %v590 = vunpack.c.l.b16 %v538
    %v591 = vunpack.c.l.b16 %v539
    %v592 = vunpack.c.l.b16 %v540
    %v593 = vunpack.c.l.b16 %v541
    %v594 = vunpack.c.l.b16 %v542
    %v595 = vunpack.c.l.b16 %v543
    %v596 = vunpack.c.l.b16 %v544
    %v597 = vunpack.c.l.b16 %v545
    %v598 = vunpack.c.l.b16 %v546
    %v599 = vpack.c.b16 %v576, %v575
    %v600 = vpack.c.b16 %v578, %v577
    %v601 = vpack.c.b16 %v580, %v579
    %v602 = vpack.c.b16 %v582, %v581
    %v603 = vpack.c.b16 %v584, %v583
    %v604 = vpack.c.b16 %v586, %v585
    %v605 = vpack.c.b16 %v588, %v587
    %v606 = vpack.c.b16 %v590, %v589
    %v607 = vpack.c.b16 %v592, %v591
    %v608 = vpack.c.b16 %v594, %v593
    %v609 = vpack.c.b16 %v596, %v595
    %v610 = vpack.c.b16 %v598, %v597
    %vm623 = vcmask 523264
    %v625 = vsel %vm623, %v522, 0
    %627 = vmatpush.bf16.msra.mxu0 %v606
    %628 = vmatpush.bf16.msra.mxu0 %v605
    %629 = vmatpush.bf16.msra.mxu0 %v604
    %630 = vmatpush.bf16.msra.mxu0 %v603
    %631 = vmatpush.bf16.msra.mxu0 %v602
    %632 = vmatpush.bf16.msra.mxu0 %v601
    %633 = vmatpush.bf16.msra.mxu0 %v600
    %634 = vmatpush.bf16.msra.mxu0 %v599
    %635 = vmatmul.bf16.gmra.mxu0 %v521
    %v636 = vpop.f32.mrf.mxu0
    %v637 = vadd.f32 %v549, %v636
    %v638 = vpop.f32.mrf.mxu0
    %639 = vdwg.mxu0
    %640 = vmatpush.bf16.msra.mxu0 0
    %641 = vmatpush.bf16.msra.mxu0 0
    %642 = vmatpush.bf16.msra.mxu0 0
    %643 = vmatpush.bf16.msra.mxu0 0
    %644 = vmatpush.bf16.msra.mxu0 %v610
    %645 = vmatpush.bf16.msra.mxu0 %v609
    %646 = vmatpush.bf16.msra.mxu0 %v608
    %647 = vmatpush.bf16.msra.mxu0 %v607
    %648 = vmatmul.bf16.gmra.mxu0 %v625
    %v649 = vpop.f32.mrf.mxu0
    %v650 = vadd.f32 %v637, %v649
    %v651 = vpop.f32.mrf.mxu0
    %652 = vdwg.mxu0
    %653 = vst [vmem:[#allocation2] sm:$0xff] %v650
    // Predicated region
    $region30: #{tpu_custom_call.1} parent=1 // pred_check
      _
    $region31: #{tpu_custom_call.1} parent=1 // pred_check_branch
      %655 = sbr.rel (0) target = $region33
    $region32: #{tpu_custom_call.1} parent=1 // pred_region
      %657 = vsyncadd [#allocation3], 0
      %s659 = sshll.u32 [#allocation2], 4
      %s660 = int_to_ptr.vmem [resolvable:$true] %s659
      %s661 = sshll.u32 %s7, 4
      %s662 = int_to_ptr.hbm [resolvable:$true] %s661
      %664 = dma.vmem_to_hbm [thread:$0]  %s660, 128, %s662, [#allocation3]
    $region33: #{tpu_custom_call.1} parent=1 // pred_fallthru
      _
    // Predicated region
    $region34: #{tpu_custom_call.1} parent=1 // pred_check
      _
    $region35: #{tpu_custom_call.1} parent=1 // pred_check_branch
      %666 = sbr.rel (0) target = $region37
    $region36: #{tpu_custom_call.1} parent=1 // pred_region
      %668 = dma.done [#allocation3], 128
    $region37: #{tpu_custom_call.1} parent=1 // pred_fallthru
      _
    %669 = vsyncpa [#allocation3], 1

</llo_original>
